<compile_context>
chip_gen: v5e
topology: v5e:2x2
jax: 0.10.0
libtpu: 0.0.40
codegen_flags: <defaults>
</compile_context>

<pallas_src>
import functools

import numpy as np

import jax
import jax.numpy as jnp
from jax import lax
from jax.experimental import pallas as pl
from jax.experimental.pallas import tpu as pltpu


# ---------------------------------------------------------------------------
# Pallas kernel: fused pre/post/main 3x3 conv + temporal zero-shift over a
# block of BG tsm groups (whole groups share one lane extent).
# ---------------------------------------------------------------------------
def _tsm_kernel(x_ref, w_ref, b_ref, m_ref, o_ref, *,
                split, tsm_length, height, width):
    # x_ref : (C, LB)            f32, channel-major; LB = BG * tsm_length*H*W
    # w_ref : (9, split, split)  bf16, tap-major fused [pre|post|main] weights
    # b_ref : (split, 1)         f32, fused bias
    # m_ref : (11, LB)           f32, rows 0..8 = tap validity masks,
    #                            row 9 = "has predecessor", row 10 = "has successor"
    # o_ref : (C, LB)            f32 output (torch channel order)
    c_total, lanes = x_ref.shape
    hw = height * width
    c4 = split // 4

    # Shift-channel activations stay f32 for rolls & masks (native VPU on v5e);
    # cast to bf16 only right before each MXU matmul.
    xf = x_ref[0:split, :] if c_total > split else x_ref[...]
    bias = b_ref[...]                                        # (split, 1) f32

    # Centre tap (kh = kw = 1): no roll, mask is all ones -> skip both.
    acc = jnp.dot(w_ref[4], xf.astype(jnp.bfloat16),
                  preferred_element_type=jnp.float32)        # (split, LB) f32

    # Remaining 8 taps: lane rotation (XLU) + 0/1 boundary mask (VPU) realise
    # the 3x3 im2col without a 9x patches buffer; each K=split dot accumulates
    # straight into `acc` (f32).
    t = 0
    for kh in range(3):
        for kw in range(3):
            if kh == 1 and kw == 1:
                t += 1
                continue
            shift = (-((kh - 1) * width + (kw - 1))) % lanes
            rolled = pltpu.roll(xf, shift, axis=1)
            tap = (rolled * m_ref[t:t + 1, :]).astype(jnp.bfloat16)
            acc = acc + jnp.dot(w_ref[t], tap,
                                preferred_element_type=jnp.float32)
            t += 1

    r = acc + bias                                           # (split, LB) f32

    # Temporal 'zero' shift inside each tsm group: move whole frames (hw lanes)
    # forward (pre) / backward (post) along the lane dim.  The pre/post masks
    # zero the group-boundary frames, so cross-group wraparound never leaks.
    pre = r[0:c4, :]
    post = r[c4:2 * c4, :]
    if tsm_length > 1:
        pre = pltpu.roll(pre, hw, axis=1)
        post = pltpu.roll(post, (lanes - hw) % lanes, axis=1)
    pre = pre * m_ref[9:10, :]
    post = post * m_ref[10:11, :]

    # Direct sliced stores: no output concat, no extra (C, LB) VMEM copy.
    o_ref[0:c4, :] = pre.astype(o_ref.dtype)
    o_ref[c4:2 * c4, :] = post.astype(o_ref.dtype)
    o_ref[2 * c4:split, :] = r[2 * c4:split, :].astype(o_ref.dtype)
    if c_total > split:
        o_ref[split:, :] = x_ref[split:, :]                  # pass-through channels


# ---------------------------------------------------------------------------
# Host-side helpers.
# ---------------------------------------------------------------------------
def _build_masks(tsm_length, height, width, groups_per_block):
    """(11, LB) f32 constants: 9 tap-validity masks + temporal pre/post masks."""
    hw = height * width
    s = tsm_length * hw
    lb = groups_per_block * s
    pos = np.arange(lb)
    h_idx = (pos % hw) // width
    w_idx = pos % width
    rows = []
    for kh in range(3):
        dh = kh - 1
        for kw in range(3):
            dw = kw - 1
            rows.append((h_idx + dh >= 0) & (h_idx + dh < height) &
                        (w_idx + dw >= 0) & (w_idx + dw < width))
    pos_in_group = pos % s
    rows.append(pos_in_group >= hw)          # output frame has a temporal predecessor
    rows.append(pos_in_group < s - hw)       # output frame has a temporal successor
    return jnp.asarray(np.stack(rows).astype(np.float32))


def _vmem_limit_and_block_budget():
    """Generation-aware VMEM limit (scoped) and per-step block budget."""
    vmem_phys = 128 * 1024 * 1024
    try:
        info = pltpu.get_tpu_info()
        vmem_phys = int(getattr(info, "vmem_capacity_bytes", vmem_phys))
    except Exception:
        pass
    # 48 MiB on v7x (64 MiB physical), 96 MiB on v5e/v6e (128 MiB physical).
    limit = min(vmem_phys * 3 // 4, 96 * 1024 * 1024)
    budget = limit * 4 // 5        # headroom for compiler-internal scratch
    return limit, budget


def _pick_groups_per_block(num_groups, channels, split, lanes_per_group,
                           budget_bytes, target_lanes=2048):
    """Largest BG whose footprint fits the budget, with 128-aligned lane blocks.

    Footprint counts input+output double-buffering, the f32 accumulator and
    tap transients, plus the resident masks/weights.  When possible we keep
    >= 2 grid steps so the 'parallel' axis can shard across v7x's two TCs.
    """
    def footprint(bg):
        lanes = bg * lanes_per_group
        io_blocks = 2 * 2 * channels * lanes * 4          # in + out, double buffered
        acc = split * lanes * 4                           # f32 accumulator
        transients = 3 * split * lanes * 4                # rolled/masked f32 + bf16 tap
        resident = 11 * lanes * 4 + 9 * split * split * 2 + split * 4
        return io_blocks + acc + transients + resident

    candidates = [bg for bg in range(1, num_groups + 1)
                  if num_groups % bg == 0
                  and ((bg * lanes_per_group) % 128 == 0 or bg == num_groups)]
    if not candidates:
        candidates = [num_groups]
    best = candidates[0]
    for bg in candidates:
        if footprint(bg) > budget_bytes:
            break
        best = bg
        if bg * lanes_per_group >= target_lanes and num_groups // bg >= 2:
            break
    return best


# ---------------------------------------------------------------------------
# learnTSM forward (matches the PyTorch module semantics, version='zero').
# ---------------------------------------------------------------------------
def learn_tsm_forward(x_nchw, params, tsm_length=3, version="zero", alpha=1):
    if version != "zero":
        # TODO(synk): the 'circulant' branch of the original PyTorch forward
        # references undefined variables (pre_conv_tensor / post_conv_tensor)
        # and would raise NameError; only the 'zero' version is implemented.
        raise NotImplementedError("only version='zero' is supported")

    T, C, H, W = x_nchw.shape
    split = C // alpha if alpha > 1 else C
    assert split % 4 == 0, "split_size must be divisible by 4"
    assert T % tsm_length == 0, "T must be a multiple of tsm_length"
    L = tsm_length
    G = T // L
    S = L * H * W
    N = G * S

    # (T, C, H, W) -> (C, G*S): channel-major, each tsm group's (time, H, W)
    # extent contiguous in the minor (lane) dimension.
    x2d = jnp.transpose(x_nchw.reshape(G, L, C, H, W), (2, 0, 1, 3, 4)).reshape(C, N)

    # Fused conv weights, tap-major: w3d[t] = W_fused[:, :, kh, kw]; bf16 MXU operands.
    w = jnp.concatenate([params["pre_w"], params["post_w"], params["main_w"]],
                        axis=0)                                   # (split, split, 3, 3)
    w3d = jnp.transpose(w, (2, 3, 0, 1)).reshape(9, split, split).astype(jnp.bfloat16)
    b2d = jnp.concatenate([params["pre_b"], params["post_b"], params["main_b"]])
    b2d = b2d.reshape(split, 1).astype(jnp.float32)

    vmem_limit, block_budget = _vmem_limit_and_block_budget()
    BG = _pick_groups_per_block(G, C, split, S, block_budget)
    LB = BG * S
    grid = (G // BG,)

    masks = _build_masks(L, H, W, BG)                             # (11, LB) f32

    kernel = functools.partial(_tsm_kernel, split=split, tsm_length=L,
                               height=H, width=W)

    flops = 2 * 9 * split * split * N
    bytes_accessed = 2 * C * N * 4 + 9 * split * split * 2 + 11 * LB * 4 + split * 4

    out2d = pl.pallas_call(
        kernel,
        # NOTE: output dtype follows the input (f32 here) to match the module;
        # if the surrounding model runs bf16 this could be bf16 to halve writes.
        out_shape=jax.ShapeDtypeStruct((C, N), x_nchw.dtype),
        grid_spec=pltpu.PrefetchScalarGridSpec(
            num_scalar_prefetch=0,
            grid=grid,
            in_specs=[
                pl.BlockSpec((C, LB), lambda g: (0, g)),
                pl.BlockSpec((9, split, split), lambda g: (0, 0, 0)),
                pl.BlockSpec((split, 1), lambda g: (0, 0)),
                pl.BlockSpec((11, LB), lambda g: (0, 0)),
            ],
            out_specs=pl.BlockSpec((C, LB), lambda g: (0, g)),
        ),
        compiler_params=pltpu.CompilerParams(
            dimension_semantics=("parallel",),
            vmem_limit_bytes=int(vmem_limit),
        ),
        cost_estimate=pl.CostEstimate(flops=int(flops), transcendentals=0,
                                      bytes_accessed=int(bytes_accessed)),
    )(x2d, w3d, b2d, masks)

    # (C, G*S) -> (T, C, H, W)
    out = jnp.transpose(out2d.reshape(C, G, L, H, W), (1, 2, 0, 3, 4))
    return out.reshape(T, C, H, W)


# ---------------------------------------------------------------------------
# Pure-JAX reference (mirrors the PyTorch forward, NCHW) for verification.
# ---------------------------------------------------------------------------
def _ref_conv(x_nchw, w_oihw, b):
    y = lax.conv_general_dilated(
        x_nchw, w_oihw, window_strides=(1, 1), padding=((1, 1), (1, 1)),
        dimension_numbers=("NCHW", "OIHW", "NCHW"))
    return y + b[None, :, None, None]


def learn_tsm_reference(x, params, tsm_length=3, alpha=1):
    T, C, H, W = x.shape
    split = C // alpha if alpha > 1 else C
    shift, main = x[:, :split], x[:, split:]
    main_conv = _ref_conv(shift, params["main_w"], params["main_b"]).reshape(
        T // tsm_length, tsm_length, split // 2, H, W)
    pre = _ref_conv(shift, params["pre_w"], params["pre_b"]).reshape(
        T // tsm_length, tsm_length, split // 4, H, W)
    post = _ref_conv(shift, params["post_w"], params["post_b"]).reshape(
        T // tsm_length, tsm_length, split // 4, H, W)
    main = main.reshape(T // tsm_length, tsm_length, C - split, H, W)
    pre = jnp.concatenate([jnp.zeros_like(pre[:, :1]), pre[:, :-1]], axis=1)
    post = jnp.concatenate([post[:, 1:], jnp.zeros_like(post[:, :1])], axis=1)
    out = jnp.concatenate([pre, post, main_conv, main], axis=2)
    return out.reshape(T, C, H, W)


# ---------------------------------------------------------------------------
if __name__ == "__main__":
    def make_params(key, split):
        k1, k2, k3, k4, k5, k6 = jax.random.split(key, 6)
        return {
            "pre_w": 0.1 * jax.random.normal(k1, (split // 4, split, 3, 3), jnp.float32),
            "pre_b": 0.1 * jax.random.normal(k2, (split // 4,), jnp.float32),
            "post_w": 0.1 * jax.random.normal(k3, (split // 4, split, 3, 3), jnp.float32),
            "post_b": 0.1 * jax.random.normal(k4, (split // 4,), jnp.float32),
            "main_w": 0.1 * jax.random.normal(k5, (split // 2, split, 3, 3), jnp.float32),
            "main_b": 0.1 * jax.random.normal(k6, (split // 2,), jnp.float32),
        }

    # learnTSM(in_channels=8), input (T, C, H, W) with T a multiple of tsm_length.
    T, C, H, W = 6, 8, 8, 8
    tsm_length = 3

    key = jax.random.PRNGKey(0)
    kx, kp1, kp2 = jax.random.split(key, 3)
    x = jax.random.normal(kx, (T, C, H, W), dtype=jnp.float32)

    # alpha=1: every channel goes through the fused conv path.
    params1 = make_params(kp1, C)
    fwd1 = jax.jit(functools.partial(learn_tsm_forward, tsm_length=tsm_length, alpha=1))
    out1 = jax.block_until_ready(fwd1(x, params1))
    ref1 = learn_tsm_reference(x, params1, tsm_length=tsm_length, alpha=1)
    err1 = float(jnp.max(jnp.abs(out1 - ref1)))

    # alpha=2: exercises the fused pass-through (non-shift) channels.
    params2 = make_params(kp2, C // 2)
    fwd2 = jax.jit(functools.partial(learn_tsm_forward, tsm_length=tsm_length, alpha=2))
    out2 = jax.block_until_ready(fwd2(x, params2))
    ref2 = learn_tsm_reference(x, params2, tsm_length=tsm_length, alpha=2)
    err2 = float(jnp.max(jnp.abs(out2 - ref2)))

    assert out1.shape == (T, C, H, W), out1.shape
    assert out2.shape == (T, C, H, W), out2.shape
    # bf16 MXU operands with f32 accumulation: allow a few e-2 absolute error
    # (real bugs -- wrong tap / shift / channel order -- give O(1) errors).
    if err1 > 5e-2 or err2 > 5e-2:
        raise AssertionError(f"mismatch vs reference: err(alpha=1)={err1}, err(alpha=2)={err2}")

    print("KERNEL_OK")
</pallas_src>

<mosaic_0001>
module attributes {stable_mosaic.version = 11 : i64} {
  func.func @_tsm_kernel(%arg0: i32, %arg1: memref<8x384xf32, #tpu.memory_space<vmem>>, %arg2: memref<9x8x8xbf16, #tpu.memory_space<vmem>>, %arg3: memref<8x1xf32, #tpu.memory_space<vmem>>, %arg4: memref<11x384xf32, #tpu.memory_space<vmem>>, %arg5: memref<8x384xf32, #tpu.memory_space<vmem>>) attributes {dimension_semantics = [#tpu.dimension_semantics<parallel>], iteration_bounds = array<i64: 1>, scalar_prefetch = 0 : i64, scratch_operands = 0 : i64, tpu.core_type = #tpu.core_type<tc>, window_params = [{transform_indices = @transform_0, window_bounds = array<i64: 8, 384>}, {pipeline_mode = #tpu.pipeline_mode<synchronous>, transform_indices = @transform_1, window_bounds = array<i64: 9, 8, 8>}, {pipeline_mode = #tpu.pipeline_mode<synchronous>, transform_indices = @transform_2, window_bounds = array<i64: 8, 1>}, {pipeline_mode = #tpu.pipeline_mode<synchronous>, transform_indices = @transform_3, window_bounds = array<i64: 11, 384>}, {transform_indices = @transform_4, window_bounds = array<i64: 8, 384>}]} {
    %c0 = arith.constant 0 : index
    %c0_0 = arith.constant 0 : index
    %0 = vector.load %arg1[%c0, %c0_0] : memref<8x384xf32, #tpu.memory_space<vmem>>, vector<8x384xf32>
    %c0_1 = arith.constant 0 : index
    %c0_2 = arith.constant 0 : index
    %1 = vector.load %arg3[%c0_1, %c0_2] : memref<8x1xf32, #tpu.memory_space<vmem>>, vector<8x1xf32>
    %c4 = arith.constant 4 : index
    %c0_3 = arith.constant 0 : index
    %c0_4 = arith.constant 0 : index
    %2 = vector.load %arg2[%c4, %c0_3, %c0_4] : memref<9x8x8xbf16, #tpu.memory_space<vmem>>, vector<1x8x8xbf16>
    %3 = vector.shape_cast %2 : vector<1x8x8xbf16> to vector<8x8xbf16>
    %4 = arith.truncf %0 : vector<8x384xf32> to vector<8x384xbf16>
    %cst = arith.constant dense<0.000000e+00> : vector<8x384xf32>
    %5 = tpu.matmul %3, %4, %cst {dimension_numbers = #tpu.dot_dimension_numbers<[1], [0], [0], [1], [0, 0, 1, 1], [], []>} : vector<8x8xbf16>, vector<8x384xbf16>, vector<8x384xf32> -> vector<8x384xf32>
    %c9_i32 = arith.constant 9 : i32
    %6 = tpu.dynamic_rotate %0 by %c9_i32 dim 1 : vector<8x384xf32>, i32 -> vector<8x384xf32>
    %c0_5 = arith.constant 0 : index
    %c0_6 = arith.constant 0 : index
    %7 = vector.load %arg4[%c0_5, %c0_6] : memref<11x384xf32, #tpu.memory_space<vmem>>, vector<1x384xf32>
    %8 = vector.broadcast %7 : vector<1x384xf32> to vector<8x384xf32>
    %9 = arith.mulf %6, %8 : vector<8x384xf32>
    %10 = arith.truncf %9 : vector<8x384xf32> to vector<8x384xbf16>
    %c0_7 = arith.constant 0 : index
    %c0_8 = arith.constant 0 : index
    %c0_9 = arith.constant 0 : index
    %11 = vector.load %arg2[%c0_7, %c0_8, %c0_9] : memref<9x8x8xbf16, #tpu.memory_space<vmem>>, vector<1x8x8xbf16>
    %12 = vector.shape_cast %11 : vector<1x8x8xbf16> to vector<8x8xbf16>
    %cst_10 = arith.constant dense<0.000000e+00> : vector<8x384xf32>
    %13 = tpu.matmul %12, %10, %cst_10 {dimension_numbers = #tpu.dot_dimension_numbers<[1], [0], [0], [1], [0, 0, 1, 1], [], []>} : vector<8x8xbf16>, vector<8x384xbf16>, vector<8x384xf32> -> vector<8x384xf32>
    %14 = arith.addf %5, %13 : vector<8x384xf32>
    %c8_i32 = arith.constant 8 : i32
    %15 = tpu.dynamic_rotate %0 by %c8_i32 dim 1 : vector<8x384xf32>, i32 -> vector<8x384xf32>
    %c1 = arith.constant 1 : index
    %c0_11 = arith.constant 0 : index
    %16 = vector.load %arg4[%c1, %c0_11] : memref<11x384xf32, #tpu.memory_space<vmem>>, vector<1x384xf32>
    %17 = vector.broadcast %16 : vector<1x384xf32> to vector<8x384xf32>
    %18 = arith.mulf %15, %17 : vector<8x384xf32>
    %19 = arith.truncf %18 : vector<8x384xf32> to vector<8x384xbf16>
    %c1_12 = arith.constant 1 : index
    %c0_13 = arith.constant 0 : index
    %c0_14 = arith.constant 0 : index
    %20 = vector.load %arg2[%c1_12, %c0_13, %c0_14] : memref<9x8x8xbf16, #tpu.memory_space<vmem>>, vector<1x8x8xbf16>
    %21 = vector.shape_cast %20 : vector<1x8x8xbf16> to vector<8x8xbf16>
    %cst_15 = arith.constant dense<0.000000e+00> : vector<8x384xf32>
    %22 = tpu.matmul %21, %19, %cst_15 {dimension_numbers = #tpu.dot_dimension_numbers<[1], [0], [0], [1], [0, 0, 1, 1], [], []>} : vector<8x8xbf16>, vector<8x384xbf16>, vector<8x384xf32> -> vector<8x384xf32>
    %23 = arith.addf %14, %22 : vector<8x384xf32>
    %c7_i32 = arith.constant 7 : i32
    %24 = tpu.dynamic_rotate %0 by %c7_i32 dim 1 : vector<8x384xf32>, i32 -> vector<8x384xf32>
    %c2 = arith.constant 2 : index
    %c0_16 = arith.constant 0 : index
    %25 = vector.load %arg4[%c2, %c0_16] : memref<11x384xf32, #tpu.memory_space<vmem>>, vector<1x384xf32>
    %26 = vector.broadcast %25 : vector<1x384xf32> to vector<8x384xf32>
    %27 = arith.mulf %24, %26 : vector<8x384xf32>
    %28 = arith.truncf %27 : vector<8x384xf32> to vector<8x384xbf16>
    %c2_17 = arith.constant 2 : index
    %c0_18 = arith.constant 0 : index
    %c0_19 = arith.constant 0 : index
    %29 = vector.load %arg2[%c2_17, %c0_18, %c0_19] : memref<9x8x8xbf16, #tpu.memory_space<vmem>>, vector<1x8x8xbf16>
    %30 = vector.shape_cast %29 : vector<1x8x8xbf16> to vector<8x8xbf16>
    %cst_20 = arith.constant dense<0.000000e+00> : vector<8x384xf32>
    %31 = tpu.matmul %30, %28, %cst_20 {dimension_numbers = #tpu.dot_dimension_numbers<[1], [0], [0], [1], [0, 0, 1, 1], [], []>} : vector<8x8xbf16>, vector<8x384xbf16>, vector<8x384xf32> -> vector<8x384xf32>
    %32 = arith.addf %23, %31 : vector<8x384xf32>
    %c1_i32 = arith.constant 1 : i32
    %33 = tpu.dynamic_rotate %0 by %c1_i32 dim 1 : vector<8x384xf32>, i32 -> vector<8x384xf32>
    %c3 = arith.constant 3 : index
    %c0_21 = arith.constant 0 : index
    %34 = vector.load %arg4[%c3, %c0_21] : memref<11x384xf32, #tpu.memory_space<vmem>>, vector<1x384xf32>
    %35 = vector.broadcast %34 : vector<1x384xf32> to vector<8x384xf32>
    %36 = arith.mulf %33, %35 : vector<8x384xf32>
    %37 = arith.truncf %36 : vector<8x384xf32> to vector<8x384xbf16>
    %c3_22 = arith.constant 3 : index
    %c0_23 = arith.constant 0 : index
    %c0_24 = arith.constant 0 : index
    %38 = vector.load %arg2[%c3_22, %c0_23, %c0_24] : memref<9x8x8xbf16, #tpu.memory_space<vmem>>, vector<1x8x8xbf16>
    %39 = vector.shape_cast %38 : vector<1x8x8xbf16> to vector<8x8xbf16>
    %cst_25 = arith.constant dense<0.000000e+00> : vector<8x384xf32>
    %40 = tpu.matmul %39, %37, %cst_25 {dimension_numbers = #tpu.dot_dimension_numbers<[1], [0], [0], [1], [0, 0, 1, 1], [], []>} : vector<8x8xbf16>, vector<8x384xbf16>, vector<8x384xf32> -> vector<8x384xf32>
    %41 = arith.addf %32, %40 : vector<8x384xf32>
    %c383_i32 = arith.constant 383 : i32
    %42 = tpu.dynamic_rotate %0 by %c383_i32 dim 1 : vector<8x384xf32>, i32 -> vector<8x384xf32>
    %c5 = arith.constant 5 : index
    %c0_26 = arith.constant 0 : index
    %43 = vector.load %arg4[%c5, %c0_26] : memref<11x384xf32, #tpu.memory_space<vmem>>, vector<1x384xf32>
    %44 = vector.broadcast %43 : vector<1x384xf32> to vector<8x384xf32>
    %45 = arith.mulf %42, %44 : vector<8x384xf32>
    %46 = arith.truncf %45 : vector<8x384xf32> to vector<8x384xbf16>
    %c5_27 = arith.constant 5 : index
    %c0_28 = arith.constant 0 : index
    %c0_29 = arith.constant 0 : index
    %47 = vector.load %arg2[%c5_27, %c0_28, %c0_29] : memref<9x8x8xbf16, #tpu.memory_space<vmem>>, vector<1x8x8xbf16>
    %48 = vector.shape_cast %47 : vector<1x8x8xbf16> to vector<8x8xbf16>
    %cst_30 = arith.constant dense<0.000000e+00> : vector<8x384xf32>
    %49 = tpu.matmul %48, %46, %cst_30 {dimension_numbers = #tpu.dot_dimension_numbers<[1], [0], [0], [1], [0, 0, 1, 1], [], []>} : vector<8x8xbf16>, vector<8x384xbf16>, vector<8x384xf32> -> vector<8x384xf32>
    %50 = arith.addf %41, %49 : vector<8x384xf32>
    %c377_i32 = arith.constant 377 : i32
    %51 = tpu.dynamic_rotate %0 by %c377_i32 dim 1 : vector<8x384xf32>, i32 -> vector<8x384xf32>
    %c6 = arith.constant 6 : index
    %c0_31 = arith.constant 0 : index
    %52 = vector.load %arg4[%c6, %c0_31] : memref<11x384xf32, #tpu.memory_space<vmem>>, vector<1x384xf32>
    %53 = vector.broadcast %52 : vector<1x384xf32> to vector<8x384xf32>
    %54 = arith.mulf %51, %53 : vector<8x384xf32>
    %55 = arith.truncf %54 : vector<8x384xf32> to vector<8x384xbf16>
    %c6_32 = arith.constant 6 : index
    %c0_33 = arith.constant 0 : index
    %c0_34 = arith.constant 0 : index
    %56 = vector.load %arg2[%c6_32, %c0_33, %c0_34] : memref<9x8x8xbf16, #tpu.memory_space<vmem>>, vector<1x8x8xbf16>
    %57 = vector.shape_cast %56 : vector<1x8x8xbf16> to vector<8x8xbf16>
    %cst_35 = arith.constant dense<0.000000e+00> : vector<8x384xf32>
    %58 = tpu.matmul %57, %55, %cst_35 {dimension_numbers = #tpu.dot_dimension_numbers<[1], [0], [0], [1], [0, 0, 1, 1], [], []>} : vector<8x8xbf16>, vector<8x384xbf16>, vector<8x384xf32> -> vector<8x384xf32>
    %59 = arith.addf %50, %58 : vector<8x384xf32>
    %c376_i32 = arith.constant 376 : i32
    %60 = tpu.dynamic_rotate %0 by %c376_i32 dim 1 : vector<8x384xf32>, i32 -> vector<8x384xf32>
    %c7 = arith.constant 7 : index
    %c0_36 = arith.constant 0 : index
    %61 = vector.load %arg4[%c7, %c0_36] : memref<11x384xf32, #tpu.memory_space<vmem>>, vector<1x384xf32>
    %62 = vector.broadcast %61 : vector<1x384xf32> to vector<8x384xf32>
    %63 = arith.mulf %60, %62 : vector<8x384xf32>
    %64 = arith.truncf %63 : vector<8x384xf32> to vector<8x384xbf16>
    %c7_37 = arith.constant 7 : index
    %c0_38 = arith.constant 0 : index
    %c0_39 = arith.constant 0 : index
    %65 = vector.load %arg2[%c7_37, %c0_38, %c0_39] : memref<9x8x8xbf16, #tpu.memory_space<vmem>>, vector<1x8x8xbf16>
    %66 = vector.shape_cast %65 : vector<1x8x8xbf16> to vector<8x8xbf16>
    %cst_40 = arith.constant dense<0.000000e+00> : vector<8x384xf32>
    %67 = tpu.matmul %66, %64, %cst_40 {dimension_numbers = #tpu.dot_dimension_numbers<[1], [0], [0], [1], [0, 0, 1, 1], [], []>} : vector<8x8xbf16>, vector<8x384xbf16>, vector<8x384xf32> -> vector<8x384xf32>
    %68 = arith.addf %59, %67 : vector<8x384xf32>
    %c375_i32 = arith.constant 375 : i32
    %69 = tpu.dynamic_rotate %0 by %c375_i32 dim 1 : vector<8x384xf32>, i32 -> vector<8x384xf32>
    %c8 = arith.constant 8 : index
    %c0_41 = arith.constant 0 : index
    %70 = vector.load %arg4[%c8, %c0_41] : memref<11x384xf32, #tpu.memory_space<vmem>>, vector<1x384xf32>
    %71 = vector.broadcast %70 : vector<1x384xf32> to vector<8x384xf32>
    %72 = arith.mulf %69, %71 : vector<8x384xf32>
    %73 = arith.truncf %72 : vector<8x384xf32> to vector<8x384xbf16>
    %c8_42 = arith.constant 8 : index
    %c0_43 = arith.constant 0 : index
    %c0_44 = arith.constant 0 : index
    %74 = vector.load %arg2[%c8_42, %c0_43, %c0_44] : memref<9x8x8xbf16, #tpu.memory_space<vmem>>, vector<1x8x8xbf16>
    %75 = vector.shape_cast %74 : vector<1x8x8xbf16> to vector<8x8xbf16>
    %cst_45 = arith.constant dense<0.000000e+00> : vector<8x384xf32>
    %76 = tpu.matmul %75, %73, %cst_45 {dimension_numbers = #tpu.dot_dimension_numbers<[1], [0], [0], [1], [0, 0, 1, 1], [], []>} : vector<8x8xbf16>, vector<8x384xbf16>, vector<8x384xf32> -> vector<8x384xf32>
    %77 = arith.addf %68, %76 : vector<8x384xf32>
    %78 = vector.broadcast %1 : vector<8x1xf32> to vector<8x384xf32>
    %79 = arith.addf %77, %78 : vector<8x384xf32>
    %80 = vector.extract_strided_slice %79 {offsets = [0, 0], sizes = [2, 384], strides = [1, 1]} : vector<8x384xf32> to vector<2x384xf32>
    %81 = vector.extract_strided_slice %79 {offsets = [2, 0], sizes = [2, 384], strides = [1, 1]} : vector<8x384xf32> to vector<2x384xf32>
    %c64_i32 = arith.constant 64 : i32
    %82 = tpu.dynamic_rotate %80 by %c64_i32 dim 1 : vector<2x384xf32>, i32 -> vector<2x384xf32>
    %c320_i32 = arith.constant 320 : i32
    %83 = tpu.dynamic_rotate %81 by %c320_i32 dim 1 : vector<2x384xf32>, i32 -> vector<2x384xf32>
    %c9 = arith.constant 9 : index
    %c0_46 = arith.constant 0 : index
    %84 = vector.load %arg4[%c9, %c0_46] : memref<11x384xf32, #tpu.memory_space<vmem>>, vector<1x384xf32>
    %85 = vector.broadcast %84 : vector<1x384xf32> to vector<2x384xf32>
    %86 = arith.mulf %82, %85 : vector<2x384xf32>
    %c10 = arith.constant 10 : index
    %c0_47 = arith.constant 0 : index
    %87 = vector.load %arg4[%c10, %c0_47] : memref<11x384xf32, #tpu.memory_space<vmem>>, vector<1x384xf32>
    %88 = vector.broadcast %87 : vector<1x384xf32> to vector<2x384xf32>
    %89 = arith.mulf %83, %88 : vector<2x384xf32>
    %c0_48 = arith.constant 0 : index
    %c0_49 = arith.constant 0 : index
    %90 = vector.load %arg5[%c0_48, %c0_49] : memref<8x384xf32, #tpu.memory_space<vmem>>, vector<2x384xf32>
    tpu.vector_store %arg5[%c0_48, %c0_49], %86 {strides = array<i32>} : memref<8x384xf32, #tpu.memory_space<vmem>>, vector<2x384xf32>,
    %c2_50 = arith.constant 2 : index
    %c0_51 = arith.constant 0 : index
    %91 = vector.load %arg5[%c2_50, %c0_51] : memref<8x384xf32, #tpu.memory_space<vmem>>, vector<2x384xf32>
    tpu.vector_store %arg5[%c2_50, %c0_51], %89 {strides = array<i32>} : memref<8x384xf32, #tpu.memory_space<vmem>>, vector<2x384xf32>,
    %92 = vector.extract_strided_slice %79 {offsets = [4, 0], sizes = [4, 384], strides = [1, 1]} : vector<8x384xf32> to vector<4x384xf32>
    %c4_52 = arith.constant 4 : index
    %c0_53 = arith.constant 0 : index
    %93 = vector.load %arg5[%c4_52, %c0_53] : memref<8x384xf32, #tpu.memory_space<vmem>>, vector<4x384xf32>
    tpu.vector_store %arg5[%c4_52, %c0_53], %92 {strides = array<i32>} : memref<8x384xf32, #tpu.memory_space<vmem>>, vector<4x384xf32>,
    return
  }
  func.func @transform_0(%arg0: i32) -> (i32, i32) {
    %c0_i32 = arith.constant 0 : i32
    %c0_i32_0 = arith.constant 0 : i32
    return %c0_i32, %arg0 : i32, i32
  }
  func.func @transform_1(%arg0: i32) -> (i32, i32, i32) {
    %c0_i32 = arith.constant 0 : i32
    %c0_i32_0 = arith.constant 0 : i32
    %c0_i32_1 = arith.constant 0 : i32
    %c0_i32_2 = arith.constant 0 : i32
    return %c0_i32, %c0_i32_0, %c0_i32_1 : i32, i32, i32
  }
  func.func @transform_2(%arg0: i32) -> (i32, i32) {
    %c0_i32 = arith.constant 0 : i32
    %c0_i32_0 = arith.constant 0 : i32
    %c0_i32_1 = arith.constant 0 : i32
    return %c0_i32, %c0_i32_0 : i32, i32
  }
  func.func @transform_3(%arg0: i32) -> (i32, i32) {
    %c0_i32 = arith.constant 0 : i32
    %c0_i32_0 = arith.constant 0 : i32
    %c0_i32_1 = arith.constant 0 : i32
    return %c0_i32, %c0_i32_0 : i32, i32
  }
  func.func @transform_4(%arg0: i32) -> (i32, i32) {
    %c0_i32 = arith.constant 0 : i32
    %c0_i32_0 = arith.constant 0 : i32
    return %c0_i32, %arg0 : i32, i32
  }
}

</mosaic_0001>

<llo_original>
// kernel: learn_tsm_forward.1
$region0: #{learn_tsm_forward.1}
  #allocation0 [shape = 'u32[]', space=smem, size = 0x4, offset = 0x4, fixed_abs, tag = 'smem constant byte address 0x4 - core index']
  #allocation1 [shape = 'u32[72,128]{1,0:T(1,128)}', space=vmem, size = 0x9000, scoped, tag = 'internal scratch']
  %s0 = inlined_call_operand.vmem [shape: f32[8,384], index: 0, kind: input, shape index: {}]
  %s1 = inlined_call_operand.vmem [shape: bf16[9,8,8], index: 1, kind: input, shape index: {}]
  %s2 = inlined_call_operand.vmem [shape: f32[8,1], index: 2, kind: input, shape index: {}]
  %s3 = inlined_call_operand.vmem [shape: f32[11,384], index: 3, kind: input, shape index: {}]
  %s4 = inlined_call_operand.vmem [shape: f32[8,384], index: 4, kind: output, shape index: {}]
  %s5 = sld [smem:[#allocation0]]
  $region26: #{learn_tsm_forward.1} parent=0
    _
  %s7 = ssub.s32 1, %s5
  %s8 = scalar_select 0, %s7, %s5
  // Predicated region
  $region2: #{learn_tsm_forward.1} parent=0 // pred_check
    _
  $region3: #{learn_tsm_forward.1} parent=0 // pred_check_branch
    %10 = sbr.rel (0) target = $region5
  $region4: #{learn_tsm_forward.1} parent=0 // pred_region
    _
  $region5: #{learn_tsm_forward.1} parent=0 // pred_fallthru
    _
  // Predicated region
  $region6: #{learn_tsm_forward.1} parent=0 // pred_check
    _
  $region7: #{learn_tsm_forward.1} parent=0 // pred_check_branch
    %12 = sbr.rel (0) target = $region9
  $region8: #{learn_tsm_forward.1} parent=0 // pred_region
    _
  $region9: #{learn_tsm_forward.1} parent=0 // pred_fallthru
    _
  // Predicated region
  $region10: #{learn_tsm_forward.1} parent=0 // pred_check
    _
  $region11: #{learn_tsm_forward.1} parent=0 // pred_check_branch
    %14 = sbr.rel (0) target = $region13
  $region12: #{learn_tsm_forward.1} parent=0 // pred_region
    _
  $region13: #{learn_tsm_forward.1} parent=0 // pred_fallthru
    _
  // Predicated region
  $region14: #{learn_tsm_forward.1} parent=0 // pred_check
    _
  $region15: #{learn_tsm_forward.1} parent=0 // pred_check_branch
    %16 = sbr.rel (0) target = $region17
  $region16: #{learn_tsm_forward.1} parent=0 // pred_region
    _
  $region17: #{learn_tsm_forward.1} parent=0 // pred_fallthru
    _
  %v18 = vld [vmem:[%s0] sm:$0xff]
  %v19 = vld [vmem:[%s0 + $0x8] sm:$0xff]
  %v20 = vld [vmem:[%s0 + $0x10] sm:$0xff]
  %v21 = vld [vmem:[%s2] sm:$0xff]
  %s22 = scalar_lea.vmem %s1, 16
  %v23 = vld [vmem:[%s22] sm:$0xf]
  %v24 = vpack.c.bf16 %v18, %v18
  %v25 = vpack.c.bf16 %v19, %v19
  %v26 = vpack.c.bf16 %v20, %v20
  %27 = vrot.lane.b32.xlu0 %v18, 9
  %v28 = vpop.permute.xlu0 %27
  %29 = vrot.lane.b32.xlu0 %v19, 9
  %v30 = vpop.permute.xlu0 %29
  %31 = vrot.lane.b32.xlu0 %v20, 9
  %v32 = vpop.permute.xlu0 %31
  %v33 = vlaneseq
  %v34 = vand.u32 %v33, 127
  %vm35 = vcmp.lt.s32.totalorder %v34, 9
  %v36 = vsel %vm35, %v30, %v32
  %v37 = vsel %vm35, %v28, %v30
  %v38 = vsel %vm35, %v32, %v28
  %v39 = vld [vmem:[%s3] ss:$8 sm:$0x7]
  %v41 = vperm.slane %v39, 0
  %v42 = vperm.slane %v39, 1
  %v43 = vperm.slane %v39, 2
  %v47 = vmul.f32 %v38, %v41
  %v48 = vmul.f32 %v37, %v42
  %v49 = vmul.f32 %v36, %v43
  %v50 = vpack.c.bf16 %v47, %v47
  %v51 = vpack.c.bf16 %v48, %v48
  %v52 = vpack.c.bf16 %v49, %v49
  %v53 = vld [vmem:[%s1] sm:$0xf]
  %vm54 = vcmask 64512
  %v56 = vsel %vm54, %v53, 0
  %vm58 = vcmask 1043456
  %v60 = vsel %vm58, %v50, 0
  %v63 = vsel %vm58, %v51, 0
  %v66 = vsel %vm58, %v52, 0
  %68 = vmatpush.bf16.msra.mxu0 0
  %69 = vmatpush.bf16.msra.mxu0 0
  %70 = vmatpush.bf16.msra.mxu0 0
  %71 = vmatpush.bf16.msra.mxu0 0
  %72 = vmatpush.bf16.msra.mxu0 0
  %73 = vmatpush.bf16.msra.mxu0 0
  %74 = vmatpush.bf16.msra.mxu0 0
  %75 = vmatpush.bf16.msra.mxu0 %v60
  %76 = vmatmul.bf16.gmra.mxu0 %v56
  %v77 = vpop.f32.mrf.mxu0
  %v78 = vadd.f32 0.0, %v77
  %v79 = vpop.f32.mrf.mxu0
  %80 = vdwg.mxu0
  %81 = vmatpush.bf16.msra.mxu0 0
  %82 = vmatpush.bf16.msra.mxu0 0
  %83 = vmatpush.bf16.msra.mxu0 0
  %84 = vmatpush.bf16.msra.mxu0 0
  %85 = vmatpush.bf16.msra.mxu0 0
  %86 = vmatpush.bf16.msra.mxu0 0
  %87 = vmatpush.bf16.msra.mxu0 0
  %88 = vmatpush.bf16.msra.mxu0 %v63
  %89 = vmatmul.bf16.gmra.mxu0 %v56
  %v90 = vpop.f32.mrf.mxu0
  %v91 = vadd.f32 0.0, %v90
  %v92 = vpop.f32.mrf.mxu0
  %93 = vdwg.mxu0
  %94 = vmatpush.bf16.msra.mxu0 0
  %95 = vmatpush.bf16.msra.mxu0 0
  %96 = vmatpush.bf16.msra.mxu0 0
  %97 = vmatpush.bf16.msra.mxu0 0
  %98 = vmatpush.bf16.msra.mxu0 0
  %99 = vmatpush.bf16.msra.mxu0 0
  %100 = vmatpush.bf16.msra.mxu0 0
  %101 = vmatpush.bf16.msra.mxu0 %v66
  %102 = vmatmul.bf16.gmra.mxu0 %v56
  %v103 = vpop.f32.mrf.mxu0
  %v104 = vadd.f32 0.0, %v103
  %v105 = vpop.f32.mrf.mxu0
  %106 = vdwg.mxu0
  %v108 = vsel %vm54, %v23, 0
  %v111 = vsel %vm58, %v24, 0
  %v114 = vsel %vm58, %v25, 0
  %v117 = vsel %vm58, %v26, 0
  %119 = vmatpush.bf16.msra.mxu0 0
  %120 = vmatpush.bf16.msra.mxu0 0
  %121 = vmatpush.bf16.msra.mxu0 0
  %122 = vmatpush.bf16.msra.mxu0 0
  %123 = vmatpush.bf16.msra.mxu0 0
  %124 = vmatpush.bf16.msra.mxu0 0
  %125 = vmatpush.bf16.msra.mxu0 0
  %126 = vmatpush.bf16.msra.mxu0 %v111
  %127 = vmatmul.bf16.gmra.mxu0 %v108
  %v128 = vpop.f32.mrf.mxu0
  %v129 = vadd.f32 %v78, %v128
  %v130 = vpop.f32.mrf.mxu0
  %131 = vdwg.mxu0
  %132 = vmatpush.bf16.msra.mxu0 0
  %133 = vmatpush.bf16.msra.mxu0 0
  %134 = vmatpush.bf16.msra.mxu0 0
  %135 = vmatpush.bf16.msra.mxu0 0
  %136 = vmatpush.bf16.msra.mxu0 0
  %137 = vmatpush.bf16.msra.mxu0 0
  %138 = vmatpush.bf16.msra.mxu0 0
  %139 = vmatpush.bf16.msra.mxu0 %v114
  %140 = vmatmul.bf16.gmra.mxu0 %v108
  %v141 = vpop.f32.mrf.mxu0
  %v142 = vadd.f32 %v91, %v141
  %v143 = vpop.f32.mrf.mxu0
  %144 = vdwg.mxu0
  %145 = vmatpush.bf16.msra.mxu0 0
  %146 = vmatpush.bf16.msra.mxu0 0
  %147 = vmatpush.bf16.msra.mxu0 0
  %148 = vmatpush.bf16.msra.mxu0 0
  %149 = vmatpush.bf16.msra.mxu0 0
  %150 = vmatpush.bf16.msra.mxu0 0
  %151 = vmatpush.bf16.msra.mxu0 0
  %152 = vmatpush.bf16.msra.mxu0 %v117
  %153 = vmatmul.bf16.gmra.mxu0 %v108
  %v154 = vpop.f32.mrf.mxu0
  %v155 = vadd.f32 %v104, %v154
  %v156 = vpop.f32.mrf.mxu0
  %157 = vdwg.mxu0
  %158 = vrot.lane.b32.xlu0 %v18, 8
  %v159 = vpop.permute.xlu0 %158
  %160 = vrot.lane.b32.xlu0 %v19, 8
  %v161 = vpop.permute.xlu0 %160
  %162 = vrot.lane.b32.xlu0 %v20, 8
  %v163 = vpop.permute.xlu0 %162
  %vm164 = vcmp.lt.s32.totalorder %v34, 8
  %v165 = vsel %vm164, %v161, %v163
  %v166 = vsel %vm164, %v159, %v161
  %v167 = vsel %vm164, %v163, %v159
  %s168 = scalar_lea.vmem %s3, 1
  %v169 = vld [vmem:[%s168] ss:$8 sm:$0x7]
  %v171 = vperm.slane %v169, 0
  %v172 = vperm.slane %v169, 1
  %v173 = vperm.slane %v169, 2
  %v177 = vmul.f32 %v167, %v171
  %v178 = vmul.f32 %v166, %v172
  %v179 = vmul.f32 %v165, %v173
  %v180 = vpack.c.bf16 %v177, %v177
  %v181 = vpack.c.bf16 %v178, %v178
  %v182 = vpack.c.bf16 %v179, %v179
  %s183 = scalar_lea.vmem %s1, 4
  %v184 = vld [vmem:[%s183] sm:$0xf]
  %v186 = vsel %vm54, %v184, 0
  %v189 = vsel %vm58, %v180, 0
  %v192 = vsel %vm58, %v181, 0
  %v195 = vsel %vm58, %v182, 0
  %197 = vmatpush.bf16.msra.mxu0 0
  %198 = vmatpush.bf16.msra.mxu0 0
  %199 = vmatpush.bf16.msra.mxu0 0
  %200 = vmatpush.bf16.msra.mxu0 0
  %201 = vmatpush.bf16.msra.mxu0 0
  %202 = vmatpush.bf16.msra.mxu0 0
  %203 = vmatpush.bf16.msra.mxu0 0
  %204 = vmatpush.bf16.msra.mxu0 %v189
  %205 = vmatmul.bf16.gmra.mxu0 %v186
  %v206 = vpop.f32.mrf.mxu0
  %v207 = vadd.f32 0.0, %v206
  %v208 = vpop.f32.mrf.mxu0
  %209 = vdwg.mxu0
  %210 = vmatpush.bf16.msra.mxu0 0
  %211 = vmatpush.bf16.msra.mxu0 0
  %212 = vmatpush.bf16.msra.mxu0 0
  %213 = vmatpush.bf16.msra.mxu0 0
  %214 = vmatpush.bf16.msra.mxu0 0
  %215 = vmatpush.bf16.msra.mxu0 0
  %216 = vmatpush.bf16.msra.mxu0 0
  %217 = vmatpush.bf16.msra.mxu0 %v192
  %218 = vmatmul.bf16.gmra.mxu0 %v186
  %v219 = vpop.f32.mrf.mxu0
  %v220 = vadd.f32 0.0, %v219
  %v221 = vpop.f32.mrf.mxu0
  %222 = vdwg.mxu0
  %223 = vmatpush.bf16.msra.mxu0 0
  %224 = vmatpush.bf16.msra.mxu0 0
  %225 = vmatpush.bf16.msra.mxu0 0
  %226 = vmatpush.bf16.msra.mxu0 0
  %227 = vmatpush.bf16.msra.mxu0 0
  %228 = vmatpush.bf16.msra.mxu0 0
  %229 = vmatpush.bf16.msra.mxu0 0
  %230 = vmatpush.bf16.msra.mxu0 %v195
  %231 = vmatmul.bf16.gmra.mxu0 %v186
  %v232 = vpop.f32.mrf.mxu0
  %v233 = vadd.f32 0.0, %v232
  %v234 = vpop.f32.mrf.mxu0
  %235 = vdwg.mxu0
  %v236 = vadd.f32 %v129, %v207
  %v237 = vadd.f32 %v142, %v220
  %v238 = vadd.f32 %v155, %v233
  %239 = vrot.lane.b32.xlu0 %v18, 7
  %v240 = vpop.permute.xlu0 %239
  %241 = vrot.lane.b32.xlu0 %v19, 7
  %v242 = vpop.permute.xlu0 %241
  %243 = vrot.lane.b32.xlu0 %v20, 7
  %v244 = vpop.permute.xlu0 %243
  %vm245 = vcmp.lt.s32.totalorder %v34, 7
  %v246 = vsel %vm245, %v242, %v244
  %v247 = vsel %vm245, %v240, %v242
  %v248 = vsel %vm245, %v244, %v240
  %s249 = scalar_lea.vmem %s3, 2
  %v250 = vld [vmem:[%s249] ss:$8 sm:$0x7]
  %v252 = vperm.slane %v250, 0
  %v253 = vperm.slane %v250, 1
  %v254 = vperm.slane %v250, 2
  %v258 = vmul.f32 %v248, %v252
  %v259 = vmul.f32 %v247, %v253
  %v260 = vmul.f32 %v246, %v254
  %v261 = vpack.c.bf16 %v258, %v258
  %v262 = vpack.c.bf16 %v259, %v259
  %v263 = vpack.c.bf16 %v260, %v260
  %s264 = scalar_lea.vmem %s1, 8
  %v265 = vld [vmem:[%s264] sm:$0xf]
  %v267 = vsel %vm54, %v265, 0
  %v270 = vsel %vm58, %v261, 0
  %v273 = vsel %vm58, %v262, 0
  %v276 = vsel %vm58, %v263, 0
  %278 = vmatpush.bf16.msra.mxu0 0
  %279 = vmatpush.bf16.msra.mxu0 0
  %280 = vmatpush.bf16.msra.mxu0 0
  %281 = vmatpush.bf16.msra.mxu0 0
  %282 = vmatpush.bf16.msra.mxu0 0
  %283 = vmatpush.bf16.msra.mxu0 0
  %284 = vmatpush.bf16.msra.mxu0 0
  %285 = vmatpush.bf16.msra.mxu0 %v270
  %286 = vmatmul.bf16.gmra.mxu0 %v267
  %v287 = vpop.f32.mrf.mxu0
  %v288 = vadd.f32 0.0, %v287
  %v289 = vpop.f32.mrf.mxu0
  %290 = vdwg.mxu0
  %291 = vmatpush.bf16.msra.mxu0 0
  %292 = vmatpush.bf16.msra.mxu0 0
  %293 = vmatpush.bf16.msra.mxu0 0
  %294 = vmatpush.bf16.msra.mxu0 0
  %295 = vmatpush.bf16.msra.mxu0 0
  %296 = vmatpush.bf16.msra.mxu0 0
  %297 = vmatpush.bf16.msra.mxu0 0
  %298 = vmatpush.bf16.msra.mxu0 %v273
  %299 = vmatmul.bf16.gmra.mxu0 %v267
  %v300 = vpop.f32.mrf.mxu0
  %v301 = vadd.f32 0.0, %v300
  %v302 = vpop.f32.mrf.mxu0
  %303 = vdwg.mxu0
  %304 = vmatpush.bf16.msra.mxu0 0
  %305 = vmatpush.bf16.msra.mxu0 0
  %306 = vmatpush.bf16.msra.mxu0 0
  %307 = vmatpush.bf16.msra.mxu0 0
  %308 = vmatpush.bf16.msra.mxu0 0
  %309 = vmatpush.bf16.msra.mxu0 0
  %310 = vmatpush.bf16.msra.mxu0 0
  %311 = vmatpush.bf16.msra.mxu0 %v276
  %312 = vmatmul.bf16.gmra.mxu0 %v267
  %v313 = vpop.f32.mrf.mxu0
  %v314 = vadd.f32 0.0, %v313
  %v315 = vpop.f32.mrf.mxu0
  %316 = vdwg.mxu0
  %v317 = vadd.f32 %v236, %v288
  %v318 = vadd.f32 %v237, %v301
  %v319 = vadd.f32 %v238, %v314
  %320 = vrot.lane.b32.xlu0 %v18, 1
  %v321 = vpop.permute.xlu0 %320
  %322 = vrot.lane.b32.xlu0 %v19, 1
  %v323 = vpop.permute.xlu0 %322
  %324 = vrot.lane.b32.xlu0 %v20, 1
  %v325 = vpop.permute.xlu0 %324
  %vm326 = vcmp.lt.s32.totalorder %v34, 1
  %v327 = vsel %vm326, %v323, %v325
  %v328 = vsel %vm326, %v321, %v323
  %v329 = vsel %vm326, %v325, %v321
  %s330 = scalar_lea.vmem %s3, 3
  %v331 = vld [vmem:[%s330] ss:$8 sm:$0x7]
  %v333 = vperm.slane %v331, 0
  %v334 = vperm.slane %v331, 1
  %v335 = vperm.slane %v331, 2
  %v339 = vmul.f32 %v329, %v333
  %v340 = vmul.f32 %v328, %v334
  %v341 = vmul.f32 %v327, %v335
  %v342 = vpack.c.bf16 %v339, %v339
  %v343 = vpack.c.bf16 %v340, %v340
  %v344 = vpack.c.bf16 %v341, %v341
  %s345 = scalar_lea.vmem %s1, 12
  %v346 = vld [vmem:[%s345] sm:$0xf]
  %v348 = vsel %vm54, %v346, 0
  %v351 = vsel %vm58, %v342, 0
  %v354 = vsel %vm58, %v343, 0
  %v357 = vsel %vm58, %v344, 0
  %359 = vmatpush.bf16.msra.mxu0 0
  %360 = vmatpush.bf16.msra.mxu0 0
  %361 = vmatpush.bf16.msra.mxu0 0
  %362 = vmatpush.bf16.msra.mxu0 0
  %363 = vmatpush.bf16.msra.mxu0 0
  %364 = vmatpush.bf16.msra.mxu0 0
  %365 = vmatpush.bf16.msra.mxu0 0
  %366 = vmatpush.bf16.msra.mxu0 %v351
  %367 = vmatmul.bf16.gmra.mxu0 %v348
  %v368 = vpop.f32.mrf.mxu0
  %v369 = vadd.f32 0.0, %v368
  %v370 = vpop.f32.mrf.mxu0
  %371 = vdwg.mxu0
  %372 = vmatpush.bf16.msra.mxu0 0
  %373 = vmatpush.bf16.msra.mxu0 0
  %374 = vmatpush.bf16.msra.mxu0 0
  %375 = vmatpush.bf16.msra.mxu0 0
  %376 = vmatpush.bf16.msra.mxu0 0
  %377 = vmatpush.bf16.msra.mxu0 0
  %378 = vmatpush.bf16.msra.mxu0 0
  %379 = vmatpush.bf16.msra.mxu0 %v354
  %380 = vmatmul.bf16.gmra.mxu0 %v348
  %v381 = vpop.f32.mrf.mxu0
  %v382 = vadd.f32 0.0, %v381
  %v383 = vpop.f32.mrf.mxu0
  %384 = vdwg.mxu0
  %385 = vmatpush.bf16.msra.mxu0 0
  %386 = vmatpush.bf16.msra.mxu0 0
  %387 = vmatpush.bf16.msra.mxu0 0
  %388 = vmatpush.bf16.msra.mxu0 0
  %389 = vmatpush.bf16.msra.mxu0 0
  %390 = vmatpush.bf16.msra.mxu0 0
  %391 = vmatpush.bf16.msra.mxu0 0
  %392 = vmatpush.bf16.msra.mxu0 %v357
  %393 = vmatmul.bf16.gmra.mxu0 %v348
  %v394 = vpop.f32.mrf.mxu0
  %v395 = vadd.f32 0.0, %v394
  %v396 = vpop.f32.mrf.mxu0
  %397 = vdwg.mxu0
  %v398 = vadd.f32 %v317, %v369
  %v399 = vadd.f32 %v318, %v382
  %v400 = vadd.f32 %v319, %v395
  %401 = vrot.lane.b32.xlu0 %v18, 127
  %v402 = vpop.permute.xlu0 %401
  %403 = vrot.lane.b32.xlu0 %v19, 127
  %v404 = vpop.permute.xlu0 %403
  %405 = vrot.lane.b32.xlu0 %v20, 127
  %v406 = vpop.permute.xlu0 %405
  %vm407 = vcmp.lt.s32.totalorder %v34, 127
  %v408 = vsel %vm407, %v404, %v406
  %v409 = vsel %vm407, %v402, %v404
  %v410 = vsel %vm407, %v406, %v402
  %s411 = scalar_lea.vmem %s3, 5
  %v412 = vld [vmem:[%s411] ss:$8 sm:$0x7]
  %v414 = vperm.slane %v412, 0
  %v415 = vperm.slane %v412, 1
  %v416 = vperm.slane %v412, 2
  %v420 = vmul.f32 %v409, %v414
  %v421 = vmul.f32 %v408, %v415
  %v422 = vmul.f32 %v410, %v416
  %v423 = vpack.c.bf16 %v420, %v420
  %v424 = vpack.c.bf16 %v421, %v421
  %v425 = vpack.c.bf16 %v422, %v422
  %s426 = scalar_lea.vmem %s1, 20
  %v427 = vld [vmem:[%s426] sm:$0xf]
  %v429 = vsel %vm54, %v427, 0
  %v432 = vsel %vm58, %v423, 0
  %v435 = vsel %vm58, %v424, 0
  %v438 = vsel %vm58, %v425, 0
  %440 = vmatpush.bf16.msra.mxu0 0
  %441 = vmatpush.bf16.msra.mxu0 0
  %442 = vmatpush.bf16.msra.mxu0 0
  %443 = vmatpush.bf16.msra.mxu0 0
  %444 = vmatpush.bf16.msra.mxu0 0
  %445 = vmatpush.bf16.msra.mxu0 0
  %446 = vmatpush.bf16.msra.mxu0 0
  %447 = vmatpush.bf16.msra.mxu0 %v432
  %448 = vmatmul.bf16.gmra.mxu0 %v429
  %v449 = vpop.f32.mrf.mxu0
  %v450 = vadd.f32 0.0, %v449
  %v451 = vpop.f32.mrf.mxu0
  %452 = vdwg.mxu0
  %453 = vmatpush.bf16.msra.mxu0 0
  %454 = vmatpush.bf16.msra.mxu0 0
  %455 = vmatpush.bf16.msra.mxu0 0
  %456 = vmatpush.bf16.msra.mxu0 0
  %457 = vmatpush.bf16.msra.mxu0 0
  %458 = vmatpush.bf16.msra.mxu0 0
  %459 = vmatpush.bf16.msra.mxu0 0
  %460 = vmatpush.bf16.msra.mxu0 %v435
  %461 = vmatmul.bf16.gmra.mxu0 %v429
  %v462 = vpop.f32.mrf.mxu0
  %v463 = vadd.f32 0.0, %v462
  %v464 = vpop.f32.mrf.mxu0
  %465 = vdwg.mxu0
  %466 = vmatpush.bf16.msra.mxu0 0
  %467 = vmatpush.bf16.msra.mxu0 0
  %468 = vmatpush.bf16.msra.mxu0 0
  %469 = vmatpush.bf16.msra.mxu0 0
  %470 = vmatpush.bf16.msra.mxu0 0
  %471 = vmatpush.bf16.msra.mxu0 0
  %472 = vmatpush.bf16.msra.mxu0 0
  %473 = vmatpush.bf16.msra.mxu0 %v438
  %474 = vmatmul.bf16.gmra.mxu0 %v429
  %v475 = vpop.f32.mrf.mxu0
  %v476 = vadd.f32 0.0, %v475
  %v477 = vpop.f32.mrf.mxu0
  %478 = vdwg.mxu0
  %v479 = vadd.f32 %v398, %v450
  %v480 = vadd.f32 %v399, %v463
  %v481 = vadd.f32 %v400, %v476
  %482 = vrot.lane.b32.xlu0 %v18, 121
  %v483 = vpop.permute.xlu0 %482
  %484 = vrot.lane.b32.xlu0 %v19, 121
  %v485 = vpop.permute.xlu0 %484
  %486 = vrot.lane.b32.xlu0 %v20, 121
  %v487 = vpop.permute.xlu0 %486
  %vm488 = vcmp.lt.s32.totalorder %v34, 121
  %v489 = vsel %vm488, %v485, %v487
  %v490 = vsel %vm488, %v483, %v485
  %v491 = vsel %vm488, %v487, %v483
  %s492 = scalar_lea.vmem %s3, 6
  %v493 = vld [vmem:[%s492] ss:$8 sm:$0x7]
  %v495 = vperm.slane %v493, 0
  %v496 = vperm.slane %v493, 1
  %v497 = vperm.slane %v493, 2
  %v501 = vmul.f32 %v490, %v495
  %v502 = vmul.f32 %v489, %v496
  %v503 = vmul.f32 %v491, %v497
  %v504 = vpack.c.bf16 %v501, %v501
  %v505 = vpack.c.bf16 %v502, %v502
  %v506 = vpack.c.bf16 %v503, %v503
  %s507 = scalar_lea.vmem %s1, 24
  %v508 = vld [vmem:[%s507] sm:$0xf]
  %v510 = vsel %vm54, %v508, 0
  %v513 = vsel %vm58, %v504, 0
  %v516 = vsel %vm58, %v505, 0
  %v519 = vsel %vm58, %v506, 0
  %521 = vmatpush.bf16.msra.mxu0 0
  %522 = vmatpush.bf16.msra.mxu0 0
  %523 = vmatpush.bf16.msra.mxu0 0
  %524 = vmatpush.bf16.msra.mxu0 0
  %525 = vmatpush.bf16.msra.mxu0 0
  %526 = vmatpush.bf16.msra.mxu0 0
  %527 = vmatpush.bf16.msra.mxu0 0
  %528 = vmatpush.bf16.msra.mxu0 %v513
  %529 = vmatmul.bf16.gmra.mxu0 %v510
  %v530 = vpop.f32.mrf.mxu0
  %v531 = vadd.f32 0.0, %v530
  %v532 = vpop.f32.mrf.mxu0
  %533 = vdwg.mxu0
  %534 = vmatpush.bf16.msra.mxu0 0
  %535 = vmatpush.bf16.msra.mxu0 0
  %536 = vmatpush.bf16.msra.mxu0 0
  %537 = vmatpush.bf16.msra.mxu0 0
  %538 = vmatpush.bf16.msra.mxu0 0
  %539 = vmatpush.bf16.msra.mxu0 0
  %540 = vmatpush.bf16.msra.mxu0 0
  %541 = vmatpush.bf16.msra.mxu0 %v516
  %542 = vmatmul.bf16.gmra.mxu0 %v510
  %v543 = vpop.f32.mrf.mxu0
  %v544 = vadd.f32 0.0, %v543
  %v545 = vpop.f32.mrf.mxu0
  %546 = vdwg.mxu0
  %547 = vmatpush.bf16.msra.mxu0 0
  %548 = vmatpush.bf16.msra.mxu0 0
  %549 = vmatpush.bf16.msra.mxu0 0
  %550 = vmatpush.bf16.msra.mxu0 0
  %551 = vmatpush.bf16.msra.mxu0 0
  %552 = vmatpush.bf16.msra.mxu0 0
  %553 = vmatpush.bf16.msra.mxu0 0
  %554 = vmatpush.bf16.msra.mxu0 %v519
  %555 = vmatmul.bf16.gmra.mxu0 %v510
  %v556 = vpop.f32.mrf.mxu0
  %v557 = vadd.f32 0.0, %v556
  %v558 = vpop.f32.mrf.mxu0
  %559 = vdwg.mxu0
  %v560 = vadd.f32 %v479, %v531
  %v561 = vadd.f32 %v480, %v544
  %v562 = vadd.f32 %v481, %v557
  %563 = vrot.lane.b32.xlu0 %v18, 120
  %v564 = vpop.permute.xlu0 %563
  %565 = vrot.lane.b32.xlu0 %v19, 120
  %v566 = vpop.permute.xlu0 %565
  %567 = vrot.lane.b32.xlu0 %v20, 120
  %v568 = vpop.permute.xlu0 %567
  %vm569 = vcmp.lt.s32.totalorder %v34, 120
  %v570 = vsel %vm569, %v566, %v568
  %v571 = vsel %vm569, %v564, %v566
  %v572 = vsel %vm569, %v568, %v564
  %s573 = scalar_lea.vmem %s3, 7
  %v574 = vld [vmem:[%s573] ss:$8 sm:$0x7]
  %v576 = vperm.slane %v574, 0
  %v577 = vperm.slane %v574, 1
  %v578 = vperm.slane %v574, 2
  %v582 = vmul.f32 %v571, %v576
  %v583 = vmul.f32 %v570, %v577
  %v584 = vmul.f32 %v572, %v578
  %v585 = vpack.c.bf16 %v582, %v582
  %v586 = vpack.c.bf16 %v583, %v583
  %v587 = vpack.c.bf16 %v584, %v584
  %s588 = scalar_lea.vmem %s1, 28
  %v589 = vld [vmem:[%s588] sm:$0xf]
  %v591 = vsel %vm54, %v589, 0
  %v594 = vsel %vm58, %v585, 0
  %v597 = vsel %vm58, %v586, 0
  %v600 = vsel %vm58, %v587, 0
  %602 = vmatpush.bf16.msra.mxu0 0
  %603 = vmatpush.bf16.msra.mxu0 0
  %604 = vmatpush.bf16.msra.mxu0 0
  %605 = vmatpush.bf16.msra.mxu0 0
  %606 = vmatpush.bf16.msra.mxu0 0
  %607 = vmatpush.bf16.msra.mxu0 0
  %608 = vmatpush.bf16.msra.mxu0 0
  %609 = vmatpush.bf16.msra.mxu0 %v594
  %610 = vmatmul.bf16.gmra.mxu0 %v591
  %v611 = vpop.f32.mrf.mxu0
  %v612 = vadd.f32 0.0, %v611
  %v613 = vpop.f32.mrf.mxu0
  %614 = vdwg.mxu0
  %615 = vmatpush.bf16.msra.mxu0 0
  %616 = vmatpush.bf16.msra.mxu0 0
  %617 = vmatpush.bf16.msra.mxu0 0
  %618 = vmatpush.bf16.msra.mxu0 0
  %619 = vmatpush.bf16.msra.mxu0 0
  %620 = vmatpush.bf16.msra.mxu0 0
  %621 = vmatpush.bf16.msra.mxu0 0
  %622 = vmatpush.bf16.msra.mxu0 %v597
  %623 = vmatmul.bf16.gmra.mxu0 %v591
  %v624 = vpop.f32.mrf.mxu0
  %v625 = vadd.f32 0.0, %v624
  %v626 = vpop.f32.mrf.mxu0
  %627 = vdwg.mxu0
  %628 = vmatpush.bf16.msra.mxu0 0
  %629 = vmatpush.bf16.msra.mxu0 0
  %630 = vmatpush.bf16.msra.mxu0 0
  %631 = vmatpush.bf16.msra.mxu0 0
  %632 = vmatpush.bf16.msra.mxu0 0
  %633 = vmatpush.bf16.msra.mxu0 0
  %634 = vmatpush.bf16.msra.mxu0 0
  %635 = vmatpush.bf16.msra.mxu0 %v600
  %636 = vmatmul.bf16.gmra.mxu0 %v591
  %v637 = vpop.f32.mrf.mxu0
  %v638 = vadd.f32 0.0, %v637
  %v639 = vpop.f32.mrf.mxu0
  %640 = vdwg.mxu0
  %v641 = vadd.f32 %v560, %v612
  %v642 = vadd.f32 %v561, %v625
  %v643 = vadd.f32 %v562, %v638
  %644 = vrot.lane.b32.xlu0 %v18, 119
  %v645 = vpop.permute.xlu0 %644
  %646 = vrot.lane.b32.xlu0 %v19, 119
  %v647 = vpop.permute.xlu0 %646
  %648 = vrot.lane.b32.xlu0 %v20, 119
  %v649 = vpop.permute.xlu0 %648
  %vm650 = vcmp.lt.s32.totalorder %v34, 119
  %v651 = vsel %vm650, %v647, %v649
  %v652 = vsel %vm650, %v645, %v647
  %v653 = vsel %vm650, %v649, %v645
  %s654 = scalar_lea.vmem %s3, 24
  %v655 = vld [vmem:[%s654] ss:$8 sm:$0x7]
  %v657 = vperm.slane %v655, 0
  %v658 = vperm.slane %v655, 1
  %v659 = vperm.slane %v655, 2
  %v663 = vmul.f32 %v652, %v657
  %v664 = vmul.f32 %v651, %v658
  %v665 = vmul.f32 %v653, %v659
  %v666 = vpack.c.bf16 %v663, %v663
  %v667 = vpack.c.bf16 %v664, %v664
  %v668 = vpack.c.bf16 %v665, %v665
  %s669 = scalar_lea.vmem %s1, 32
  %v670 = vld [vmem:[%s669] sm:$0xf]
  %v672 = vsel %vm54, %v670, 0
  %v675 = vsel %vm58, %v666, 0
  %v678 = vsel %vm58, %v667, 0
  %v681 = vsel %vm58, %v668, 0
  %683 = vmatpush.bf16.msra.mxu0 0
  %684 = vmatpush.bf16.msra.mxu0 0
  %685 = vmatpush.bf16.msra.mxu0 0
  %686 = vmatpush.bf16.msra.mxu0 0
  %687 = vmatpush.bf16.msra.mxu0 0
  %688 = vmatpush.bf16.msra.mxu0 0
  %689 = vmatpush.bf16.msra.mxu0 0
  %690 = vmatpush.bf16.msra.mxu0 %v675
  %691 = vmatmul.bf16.gmra.mxu0 %v672
  %v692 = vpop.f32.mrf.mxu0
  %v693 = vadd.f32 0.0, %v692
  %v694 = vpop.f32.mrf.mxu0
  %695 = vdwg.mxu0
  %696 = vmatpush.bf16.msra.mxu0 0
  %697 = vmatpush.bf16.msra.mxu0 0
  %698 = vmatpush.bf16.msra.mxu0 0
  %699 = vmatpush.bf16.msra.mxu0 0
  %700 = vmatpush.bf16.msra.mxu0 0
  %701 = vmatpush.bf16.msra.mxu0 0
  %702 = vmatpush.bf16.msra.mxu0 0
  %703 = vmatpush.bf16.msra.mxu0 %v678
  %704 = vmatmul.bf16.gmra.mxu0 %v672
  %v705 = vpop.f32.mrf.mxu0
  %v706 = vadd.f32 0.0, %v705
  %v707 = vpop.f32.mrf.mxu0
  %708 = vdwg.mxu0
  %709 = vmatpush.bf16.msra.mxu0 0
  %710 = vmatpush.bf16.msra.mxu0 0
  %711 = vmatpush.bf16.msra.mxu0 0
  %712 = vmatpush.bf16.msra.mxu0 0
  %713 = vmatpush.bf16.msra.mxu0 0
  %714 = vmatpush.bf16.msra.mxu0 0
  %715 = vmatpush.bf16.msra.mxu0 0
  %716 = vmatpush.bf16.msra.mxu0 %v681
  %717 = vmatmul.bf16.gmra.mxu0 %v672
  %v718 = vpop.f32.mrf.mxu0
  %v719 = vadd.f32 0.0, %v718
  %v720 = vpop.f32.mrf.mxu0
  %721 = vdwg.mxu0
  %v722 = vadd.f32 %v641, %v693
  %v723 = vadd.f32 %v642, %v706
  %v724 = vadd.f32 %v643, %v719
  %726 = vset.pattern.permute.xlu0 0
  %727 = vperm.xlu0 %726, %v21
  %v728 = vpop.permute.xlu0 %727
  %v730 = vadd.f32 %v722, %v728
  %v731 = vadd.f32 %v723, %v728
  %v732 = vadd.f32 %v724, %v728
  %733 = vrot.lane.b32.xlu0 %v730, 64
  %v734 = vpop.permute.xlu0 %733
  %735 = vrot.lane.b32.xlu0 %v731, 64
  %v736 = vpop.permute.xlu0 %735
  %737 = vrot.lane.b32.xlu0 %v732, 64
  %v738 = vpop.permute.xlu0 %737
  %vm739 = vcmp.lt.s32.totalorder %v34, 64
  %v740 = vsel %vm739, %v736, %v738
  %v741 = vsel %vm739, %v734, %v736
  %v742 = vsel %vm739, %v738, %v734
  %v746 = vrot.slane %v730, 2
  %v747 = vrot.slane %v731, 2
  %v748 = vrot.slane %v732, 2
  %752 = vrot.lane.b32.xlu0 %v746, 64
  %v753 = vpop.permute.xlu0 %752
  %754 = vrot.lane.b32.xlu0 %v747, 64
  %v755 = vpop.permute.xlu0 %754
  %756 = vrot.lane.b32.xlu0 %v748, 64
  %v757 = vpop.permute.xlu0 %756
  %v758 = vsel %vm739, %v755, %v757
  %v759 = vsel %vm739, %v753, %v755
  %v760 = vsel %vm739, %v757, %v753
  %s761 = scalar_lea.vmem %s3, 25
  %v762 = vld [vmem:[%s761] ss:$8 sm:$0x7]
  %v764 = vperm.slane %v762, 0
  %v765 = vperm.slane %v762, 1
  %v766 = vperm.slane %v762, 2
  %v770 = vmul.f32 %v742, %v764
  %v771 = vmul.f32 %v741, %v765
  %v772 = vmul.f32 %v740, %v766
  %s773 = scalar_lea.vmem %s3, 26
  %v774 = vld [vmem:[%s773] ss:$8 sm:$0x7]
  %v776 = vperm.slane %v774, 0
  %v777 = vperm.slane %v774, 1
  %v778 = vperm.slane %v774, 2
  %v782 = vmul.f32 %v759, %v776
  %v783 = vmul.f32 %v758, %v777
  %v784 = vmul.f32 %v760, %v778
  %785 = vst [vmem:[%s4] sm:$0x3] %v770
  %786 = vst [vmem:[%s4 + $0x8] sm:$0x3] %v771
  %787 = vst [vmem:[%s4 + $0x10] sm:$0x3] %v772
  %v791 = vrot.slane %v782, 6
  %v792 = vrot.slane %v783, 6
  %v793 = vrot.slane %v784, 6
  %797 = vst [vmem:[%s4] sm:$0xc] %v791
  %798 = vst [vmem:[%s4 + $0x8] sm:$0xc] %v792
  %799 = vst [vmem:[%s4 + $0x10] sm:$0xc] %v793
  %800 = vst [vmem:[%s4] sm:$0xf0] %v730
  %801 = vst [vmem:[%s4 + $0x8] sm:$0xf0] %v731
  %802 = vst [vmem:[%s4 + $0x10] sm:$0xf0] %v732
  // Predicated region
  $region18: #{learn_tsm_forward.1} parent=0 // pred_check
    _
  $region19: #{learn_tsm_forward.1} parent=0 // pred_check_branch
    %804 = sbr.rel (0) target = $region21
  $region20: #{learn_tsm_forward.1} parent=0 // pred_region
    _
  $region21: #{learn_tsm_forward.1} parent=0 // pred_fallthru
    _
  // Predicated region
  $region22: #{learn_tsm_forward.1} parent=0 // pred_check
    _
  $region23: #{learn_tsm_forward.1} parent=0 // pred_check_branch
    %806 = sbr.rel (0) target = $region25
  $region24: #{learn_tsm_forward.1} parent=0 // pred_region
    _
  $region25: #{learn_tsm_forward.1} parent=0 // pred_fallthru
    _

</llo_original>
